<compile_context>
chip_gen: v6e
topology: v6e:2x2x1
jax: 0.10.0
libtpu: 0.0.40
codegen_flags: <defaults>
</compile_context>

<pallas_src>
import jax
import jax.numpy as jnp
from jax.experimental import pallas as pl
from jax.experimental.pallas import tpu as pltpu

_EPS = 1e-5      # nn.BatchNorm1d default
_SLOPE = 0.1     # leaky_relu negative slope
_P_DROP = 0.5    # F.dropout default (training=True)


def _leaky_relu(x, slope=_SLOPE):
    # x if x >= 0 else slope*x, valid for 0 < slope < 1
    return jnp.maximum(x, slope * x)


def _make_kernel(N, C, L, matmul_dtype):
    inv_nl = 1.0 / float(N * L)

    def mean_nl(h):
        # per-channel mean over (N, L): lane reduce, then leading-dim reduce
        s = jnp.sum(h, axis=2, keepdims=True)     # (N, C, 1)
        s = jnp.sum(s, axis=0, keepdims=True)     # (1, C, 1)
        return s * inv_nl

    def batchnorm(h, g_ref, b_ref):
        # training-mode BatchNorm1d (biased batch variance), folded to one FMA
        mean = mean_nl(h)
        var = mean_nl(jnp.square(h - mean))
        scale = g_ref[...] * jax.lax.rsqrt(var + _EPS)   # (C,1)*(1,C,1) -> (1,C,1)
        shift = b_ref[...] - mean * scale
        return h * scale + shift

    def kernel(x_ref, mask_ref, w2_ref, g2_ref, b2_ref, w1_ref, g1_ref, b1_ref, o_ref):
        # lane-index boundary masks, hoisted once and reused by both convs
        lane = jax.lax.broadcasted_iota(jnp.int32, (1, 1, L), 2)
        left_ok = lane >= 1          # l-1 exists within the sample
        right_ok = lane <= L - 2     # l+1 exists within the sample

        def conv_k3(h, w3_ref):
            # Conv1d(k=3, stride=1, padding=1) with all three taps fused into ONE matmul:
            #   X3[:, k*C + c, l] = h[:, c, l + k - 1]   (zero padded at sequence edges)
            #   out[n, o, l]      = sum_j W3[o, j] * X3[n, j, l]
            hl = jnp.where(left_ok, pltpu.roll(h, shift=1, axis=2), 0.0)        # h[..., l-1]
            hr = jnp.where(right_ok, pltpu.roll(h, shift=L - 1, axis=2), 0.0)   # h[..., l+1]
            x3 = jnp.concatenate([hl, h, hr], axis=1).astype(matmul_dtype)      # (N, 3C, L)
            w3 = jnp.broadcast_to(w3_ref[...].astype(matmul_dtype), (N, C, 3 * C))
            return jnp.einsum("noj,njl->nol", w3, x3,
                              preferred_element_type=jnp.float32)               # (N, C, L) f32

        x = x_ref[...]

        # conv2 -> bn2 -> leaky_relu(0.1)
        h = _leaky_relu(batchnorm(conv_k3(x, w2_ref), g2_ref, b2_ref))

        # dropout: mask is pre-scaled (0 or 1/(1-p)) -> a single multiply
        h = h * mask_ref[...]

        # conv1 -> bn1 -> identity shortcut -> leaky_relu(0.1)
        h = batchnorm(conv_k3(h, w1_ref), g1_ref, b1_ref)
        o_ref[...] = _leaky_relu(h + x)

    return kernel


def _pick_matmul_dtype():
    """bf16 MXU inputs (f32 accumulate) on v6e/v7x; keep f32 on v5e / CPU-interpret."""
    try:
        kind = jax.devices()[0].device_kind.lower()
    except Exception:
        return jnp.float32
    if any(tag in kind for tag in ("v6", "v7", "tpu7")):
        return jnp.bfloat16
    return jnp.float32


def _round_up(v, m):
    return ((v + m - 1) // m) * m


def basic_block_dec_forward(x_ncl, params, dropout_key, p_drop=_P_DROP, matmul_dtype=None):
    """Fused forward of BasicBlockDec(in_planes, stride=1).

    x_ncl:   (N, C, L) float32, PyTorch NCW layout (used as-is; no wrapper transposes).
    params:  'w2','w1': (C, C, 3) torch-layout conv weights; 'g2','b2','g1','b1': (C,).
    dropout_key: jax PRNG key (vary per training step for fresh dropout masks).
    """
    N, C, L = x_ncl.shape
    if matmul_dtype is None:
        matmul_dtype = _pick_matmul_dtype()

    x = x_ncl.astype(jnp.float32)

    # Dropout mask is built outside the kernel (pltpu.prng_* has no interpret/CPU lowering)
    # and pre-scaled so the kernel needs only one multiply.
    keep = jax.random.bernoulli(dropout_key, 1.0 - p_drop, (N, C, L))
    drop_mask = keep.astype(jnp.float32) * (1.0 / (1.0 - p_drop))

    def pack_w(w):  # (Co, Ci, K) torch layout -> (Co, K*Ci): column j = k*C + c
        return jnp.transpose(w.astype(jnp.float32), (0, 2, 1)).reshape(C, 3 * C)

    w2 = pack_w(params["w2"])
    w1 = pack_w(params["w1"])
    g2 = params["g2"].astype(jnp.float32).reshape(C, 1)
    b2 = params["b2"].astype(jnp.float32).reshape(C, 1)
    g1 = params["g1"].astype(jnp.float32).reshape(C, 1)
    b1 = params["b1"].astype(jnp.float32).reshape(C, 1)

    # VMEM budget: ~a dozen live (N, C, L) f32 slabs (x, mask, X3, rolled temps, conv out,
    # BN temps, out) plus IO buffers, against each slab padded to (8, 128) vreg tiles.
    padded_slab = N * _round_up(C, 8) * _round_up(L, 128) * 4
    vmem_limit = int(min(max(24 * padded_slab + (1 << 20), 8 << 20), 48 << 20))

    flops = 2 * (2 * N * L * C * 3 * C) + 30 * N * C * L       # 2 fused convs + elementwise
    bytes_accessed = 3 * 4 * N * C * L + 4 * (2 * C * 3 * C + 4 * C)
    cost = pl.CostEstimate(flops=flops, transcendentals=2 * C, bytes_accessed=bytes_accessed)

    vmem = pl.BlockSpec(memory_space=pltpu.MemorySpace.VMEM)

    return pl.pallas_call(
        _make_kernel(N, C, L, matmul_dtype),
        out_shape=jax.ShapeDtypeStruct((N, C, L), jnp.float32),
        in_specs=[vmem] * 8,
        out_specs=vmem,
        compiler_params=pltpu.CompilerParams(vmem_limit_bytes=vmem_limit),
        cost_estimate=cost,
    )(x, drop_mask, w2, g2, b2, w1, g1, b1)


def _reference_forward(x, params, drop_mask, matmul_dtype):
    """Pure-JAX reference of the PyTorch forward (training-mode BN, same dropout mask)."""
    N, C, L = x.shape

    def conv_k3(h, w):  # w: (Co, Ci, 3) torch layout
        hp = jnp.pad(h, ((0, 0), (0, 0), (1, 1)))
        out = jnp.zeros((N, C, L), jnp.float32)
        for k in range(3):
            out = out + jnp.einsum(
                "ncl,oc->nol",
                hp[:, :, k:k + L].astype(matmul_dtype),
                w[:, :, k].astype(matmul_dtype),
                preferred_element_type=jnp.float32,
                precision=jax.lax.Precision.HIGHEST,
            )
        return out

    def bn(h, g, b):
        m = jnp.mean(h, axis=(0, 2), keepdims=True)
        v = jnp.mean(jnp.square(h - m), axis=(0, 2), keepdims=True)
        return (h - m) * jax.lax.rsqrt(v + _EPS) * g.reshape(1, C, 1) + b.reshape(1, C, 1)

    lrelu = lambda t: jnp.where(t >= 0, t, _SLOPE * t)
    h = lrelu(bn(conv_k3(x, params["w2"]), params["g2"], params["b2"]))
    h = h * drop_mask
    h = bn(conv_k3(h, params["w1"]), params["g1"], params["b1"])
    return lrelu(h + x)


def init_params(key, in_planes):
    """Synthetic parameters with BasicBlockDec(in_planes, stride=1) shapes.
    Conv weights are stored in torch layout (C_out, C_in, K=3)."""
    C = in_planes
    k1, k2, k3, k4, k5, k6 = jax.random.split(key, 6)
    bound = 1.0 / jnp.sqrt(3.0 * C)
    return {
        "w2": jax.random.uniform(k1, (C, C, 3), jnp.float32, -bound, bound),
        "w1": jax.random.uniform(k4, (C, C, 3), jnp.float32, -bound, bound),
        "g2": 1.0 + 0.1 * jax.random.normal(k2, (C,), jnp.float32),
        "b2": 0.1 * jax.random.normal(k3, (C,), jnp.float32),
        "g1": 1.0 + 0.1 * jax.random.normal(k5, (C,), jnp.float32),
        "b1": 0.1 * jax.random.normal(k6, (C,), jnp.float32),
    }


if __name__ == "__main__":
    root = jax.random.PRNGKey(0)
    kx, kp, kd = jax.random.split(root, 3)

    N, C, L = 2, 8, 16          # batch=2, in_planes=8, sequence length=16
    x = jax.random.normal(kx, (N, C, L), jnp.float32)
    params = init_params(kp, C)

    out = basic_block_dec_forward(x, params, kd)
    out = jax.block_until_ready(out)

    assert out.shape == (N, C, L), out.shape
    assert bool(jnp.all(jnp.isfinite(out)))

    # Cross-check against a pure-JAX reference built with the identical dropout mask.
    keep = jax.random.bernoulli(kd, 1.0 - _P_DROP, (N, C, L))
    drop_mask = keep.astype(jnp.float32) * (1.0 / (1.0 - _P_DROP))
    ref = _reference_forward(x, params, drop_mask, _pick_matmul_dtype())
    max_err = float(jnp.max(jnp.abs(out - ref)))
    assert bool(jnp.allclose(out, ref, atol=3e-2, rtol=3e-2)), max_err

    print("KERNEL_OK")
</pallas_src>

<mosaic_0001>
module attributes {stable_mosaic.version = 11 : i64} {
  func.func @kernel(%arg0: memref<2x8x16xf32, #tpu.memory_space<vmem>>, %arg1: memref<2x8x16xf32, #tpu.memory_space<vmem>>, %arg2: memref<8x24xf32, #tpu.memory_space<vmem>>, %arg3: memref<8x1xf32, #tpu.memory_space<vmem>>, %arg4: memref<8x1xf32, #tpu.memory_space<vmem>>, %arg5: memref<8x24xf32, #tpu.memory_space<vmem>>, %arg6: memref<8x1xf32, #tpu.memory_space<vmem>>, %arg7: memref<8x1xf32, #tpu.memory_space<vmem>>, %arg8: memref<2x8x16xf32, #tpu.memory_space<vmem>>) attributes {dimension_semantics = [], scalar_prefetch = 0 : i64, scratch_operands = 0 : i64, tpu.core_type = #tpu.core_type<tc>} {
    %0 = tpu.iota {dimensions = array<i32: 2>} : vector<1x1x16xi32>
    %c1_i32 = arith.constant 1 : i32
    %1 = vector.broadcast %c1_i32 : i32 to vector<1x1x16xi32>
    %2 = arith.cmpi sge, %0, %1 : vector<1x1x16xi32>
    %c14_i32 = arith.constant 14 : i32
    %3 = vector.broadcast %c14_i32 : i32 to vector<1x1x16xi32>
    %4 = arith.cmpi sle, %0, %3 : vector<1x1x16xi32>
    %c0 = arith.constant 0 : index
    %c0_0 = arith.constant 0 : index
    %c0_1 = arith.constant 0 : index
    %5 = vector.load %arg0[%c0, %c0_0, %c0_1] : memref<2x8x16xf32, #tpu.memory_space<vmem>>, vector<2x8x16xf32>
    %c1_i32_2 = arith.constant 1 : i32
    %6 = tpu.dynamic_rotate %5 by %c1_i32_2 dim 2 : vector<2x8x16xf32>, i32 -> vector<2x8x16xf32>
    %cst = arith.constant 0.000000e+00 : f32
    %7 = vector.shape_cast %2 : vector<1x1x16xi1> to vector<1x1x16xi1>
    %8 = vector.broadcast %7 : vector<1x1x16xi1> to vector<2x8x16xi1>
    %9 = vector.broadcast %cst : f32 to vector<2x8x16xf32>
    %10 = arith.select %8, %6, %9 : vector<2x8x16xi1>, vector<2x8x16xf32>
    %c15_i32 = arith.constant 15 : i32
    %11 = tpu.dynamic_rotate %5 by %c15_i32 dim 2 : vector<2x8x16xf32>, i32 -> vector<2x8x16xf32>
    %cst_3 = arith.constant 0.000000e+00 : f32
    %12 = vector.shape_cast %4 : vector<1x1x16xi1> to vector<1x1x16xi1>
    %13 = vector.broadcast %12 : vector<1x1x16xi1> to vector<2x8x16xi1>
    %14 = vector.broadcast %cst_3 : f32 to vector<2x8x16xf32>
    %15 = arith.select %13, %11, %14 : vector<2x8x16xi1>, vector<2x8x16xf32>
    %16 = tpu.concatenate %10, %5, %15 in 1 : vector<2x8x16xf32>, vector<2x8x16xf32>, vector<2x8x16xf32> -> vector<2x24x16xf32>
    %c0_4 = arith.constant 0 : index
    %c0_5 = arith.constant 0 : index
    %17 = vector.load %arg2[%c0_4, %c0_5] : memref<8x24xf32, #tpu.memory_space<vmem>>, vector<8x24xf32>
    %18 = vector.shape_cast %17 : vector<8x24xf32> to vector<1x8x24xf32>
    %19 = vector.broadcast %18 : vector<1x8x24xf32> to vector<2x8x24xf32>
    "tpu.trace_start"() <{level = 10 : i32, message = "noj,njl->nol"}> : () -> ()
    %cst_6 = arith.constant dense<0.000000e+00> : vector<2x8x16xf32>
    %20 = tpu.matmul %19, %16, %cst_6 {dimension_numbers = #tpu.dot_dimension_numbers<[2], [1], [1], [2], [0, 0, 0, 1, 1, 2], [0], [0]>} : vector<2x8x24xf32>, vector<2x24x16xf32>, vector<2x8x16xf32> -> vector<2x8x16xf32>
    "tpu.trace_stop"() : () -> ()
    %cst_7 = arith.constant dense<0.000000e+00> : vector<2x8xf32>
    %21 = vector.multi_reduction <add>, %20, %cst_7 [2] : vector<2x8x16xf32> to vector<2x8xf32>
    %22 = vector.shape_cast %21 : vector<2x8xf32> to vector<2x8x1xf32>
    %cst_8 = arith.constant dense<0.000000e+00> : vector<8x1xf32>
    %23 = vector.multi_reduction <add>, %22, %cst_8 [0] : vector<2x8x1xf32> to vector<8x1xf32>
    %24 = vector.shape_cast %23 : vector<8x1xf32> to vector<1x8x1xf32>
    %cst_9 = arith.constant 3.125000e-02 : f32
    %25 = vector.broadcast %cst_9 : f32 to vector<1x8x1xf32>
    %26 = arith.mulf %24, %25 : vector<1x8x1xf32>
    %27 = vector.broadcast %26 : vector<1x8x1xf32> to vector<2x8x16xf32>
    %28 = arith.subf %20, %27 : vector<2x8x16xf32>
    %29 = arith.mulf %28, %28 : vector<2x8x16xf32>
    %cst_10 = arith.constant dense<0.000000e+00> : vector<2x8xf32>
    %30 = vector.multi_reduction <add>, %29, %cst_10 [2] : vector<2x8x16xf32> to vector<2x8xf32>
    %31 = vector.shape_cast %30 : vector<2x8xf32> to vector<2x8x1xf32>
    %cst_11 = arith.constant dense<0.000000e+00> : vector<8x1xf32>
    %32 = vector.multi_reduction <add>, %31, %cst_11 [0] : vector<2x8x1xf32> to vector<8x1xf32>
    %33 = vector.shape_cast %32 : vector<8x1xf32> to vector<1x8x1xf32>
    %cst_12 = arith.constant 3.125000e-02 : f32
    %34 = vector.broadcast %cst_12 : f32 to vector<1x8x1xf32>
    %35 = arith.mulf %33, %34 : vector<1x8x1xf32>
    %c0_13 = arith.constant 0 : index
    %c0_14 = arith.constant 0 : index
    %36 = vector.load %arg3[%c0_13, %c0_14] : memref<8x1xf32, #tpu.memory_space<vmem>>, vector<8x1xf32>
    %cst_15 = arith.constant 9.99999974E-6 : f32
    %37 = vector.broadcast %cst_15 : f32 to vector<1x8x1xf32>
    %38 = arith.addf %35, %37 : vector<1x8x1xf32>
    %39 = math.rsqrt %38 : vector<1x8x1xf32>
    %40 = vector.shape_cast %36 : vector<8x1xf32> to vector<1x8x1xf32>
    %41 = arith.mulf %40, %39 : vector<1x8x1xf32>
    %c0_16 = arith.constant 0 : index
    %c0_17 = arith.constant 0 : index
    %42 = vector.load %arg4[%c0_16, %c0_17] : memref<8x1xf32, #tpu.memory_space<vmem>>, vector<8x1xf32>
    %43 = arith.mulf %26, %41 : vector<1x8x1xf32>
    %44 = vector.shape_cast %42 : vector<8x1xf32> to vector<1x8x1xf32>
    %45 = arith.subf %44, %43 : vector<1x8x1xf32>
    %46 = vector.broadcast %41 : vector<1x8x1xf32> to vector<2x8x16xf32>
    %47 = arith.mulf %20, %46 : vector<2x8x16xf32>
    %48 = vector.broadcast %45 : vector<1x8x1xf32> to vector<2x8x16xf32>
    %49 = arith.addf %47, %48 : vector<2x8x16xf32>
    %cst_18 = arith.constant 1.000000e-01 : f32
    %50 = vector.broadcast %cst_18 : f32 to vector<2x8x16xf32>
    %51 = arith.mulf %50, %49 : vector<2x8x16xf32>
    %52 = arith.maximumf %49, %51 : vector<2x8x16xf32>
    %c0_19 = arith.constant 0 : index
    %c0_20 = arith.constant 0 : index
    %c0_21 = arith.constant 0 : index
    %53 = vector.load %arg1[%c0_19, %c0_20, %c0_21] : memref<2x8x16xf32, #tpu.memory_space<vmem>>, vector<2x8x16xf32>
    %54 = arith.mulf %52, %53 : vector<2x8x16xf32>
    %c1_i32_22 = arith.constant 1 : i32
    %55 = tpu.dynamic_rotate %54 by %c1_i32_22 dim 2 : vector<2x8x16xf32>, i32 -> vector<2x8x16xf32>
    %cst_23 = arith.constant 0.000000e+00 : f32
    %56 = vector.shape_cast %2 : vector<1x1x16xi1> to vector<1x1x16xi1>
    %57 = vector.broadcast %56 : vector<1x1x16xi1> to vector<2x8x16xi1>
    %58 = vector.broadcast %cst_23 : f32 to vector<2x8x16xf32>
    %59 = arith.select %57, %55, %58 : vector<2x8x16xi1>, vector<2x8x16xf32>
    %c15_i32_24 = arith.constant 15 : i32
    %60 = tpu.dynamic_rotate %54 by %c15_i32_24 dim 2 : vector<2x8x16xf32>, i32 -> vector<2x8x16xf32>
    %cst_25 = arith.constant 0.000000e+00 : f32
    %61 = vector.shape_cast %4 : vector<1x1x16xi1> to vector<1x1x16xi1>
    %62 = vector.broadcast %61 : vector<1x1x16xi1> to vector<2x8x16xi1>
    %63 = vector.broadcast %cst_25 : f32 to vector<2x8x16xf32>
    %64 = arith.select %62, %60, %63 : vector<2x8x16xi1>, vector<2x8x16xf32>
    %65 = tpu.concatenate %59, %54, %64 in 1 : vector<2x8x16xf32>, vector<2x8x16xf32>, vector<2x8x16xf32> -> vector<2x24x16xf32>
    %c0_26 = arith.constant 0 : index
    %c0_27 = arith.constant 0 : index
    %66 = vector.load %arg5[%c0_26, %c0_27] : memref<8x24xf32, #tpu.memory_space<vmem>>, vector<8x24xf32>
    %67 = vector.shape_cast %66 : vector<8x24xf32> to vector<1x8x24xf32>
    %68 = vector.broadcast %67 : vector<1x8x24xf32> to vector<2x8x24xf32>
    "tpu.trace_start"() <{level = 10 : i32, message = "noj,njl->nol"}> : () -> ()
    %cst_28 = arith.constant dense<0.000000e+00> : vector<2x8x16xf32>
    %69 = tpu.matmul %68, %65, %cst_28 {dimension_numbers = #tpu.dot_dimension_numbers<[2], [1], [1], [2], [0, 0, 0, 1, 1, 2], [0], [0]>} : vector<2x8x24xf32>, vector<2x24x16xf32>, vector<2x8x16xf32> -> vector<2x8x16xf32>
    "tpu.trace_stop"() : () -> ()
    %cst_29 = arith.constant dense<0.000000e+00> : vector<2x8xf32>
    %70 = vector.multi_reduction <add>, %69, %cst_29 [2] : vector<2x8x16xf32> to vector<2x8xf32>
    %71 = vector.shape_cast %70 : vector<2x8xf32> to vector<2x8x1xf32>
    %cst_30 = arith.constant dense<0.000000e+00> : vector<8x1xf32>
    %72 = vector.multi_reduction <add>, %71, %cst_30 [0] : vector<2x8x1xf32> to vector<8x1xf32>
    %73 = vector.shape_cast %72 : vector<8x1xf32> to vector<1x8x1xf32>
    %cst_31 = arith.constant 3.125000e-02 : f32
    %74 = vector.broadcast %cst_31 : f32 to vector<1x8x1xf32>
    %75 = arith.mulf %73, %74 : vector<1x8x1xf32>
    %76 = vector.broadcast %75 : vector<1x8x1xf32> to vector<2x8x16xf32>
    %77 = arith.subf %69, %76 : vector<2x8x16xf32>
    %78 = arith.mulf %77, %77 : vector<2x8x16xf32>
    %cst_32 = arith.constant dense<0.000000e+00> : vector<2x8xf32>
    %79 = vector.multi_reduction <add>, %78, %cst_32 [2] : vector<2x8x16xf32> to vector<2x8xf32>
    %80 = vector.shape_cast %79 : vector<2x8xf32> to vector<2x8x1xf32>
    %cst_33 = arith.constant dense<0.000000e+00> : vector<8x1xf32>
    %81 = vector.multi_reduction <add>, %80, %cst_33 [0] : vector<2x8x1xf32> to vector<8x1xf32>
    %82 = vector.shape_cast %81 : vector<8x1xf32> to vector<1x8x1xf32>
    %cst_34 = arith.constant 3.125000e-02 : f32
    %83 = vector.broadcast %cst_34 : f32 to vector<1x8x1xf32>
    %84 = arith.mulf %82, %83 : vector<1x8x1xf32>
    %c0_35 = arith.constant 0 : index
    %c0_36 = arith.constant 0 : index
    %85 = vector.load %arg6[%c0_35, %c0_36] : memref<8x1xf32, #tpu.memory_space<vmem>>, vector<8x1xf32>
    %cst_37 = arith.constant 9.99999974E-6 : f32
    %86 = vector.broadcast %cst_37 : f32 to vector<1x8x1xf32>
    %87 = arith.addf %84, %86 : vector<1x8x1xf32>
    %88 = math.rsqrt %87 : vector<1x8x1xf32>
    %89 = vector.shape_cast %85 : vector<8x1xf32> to vector<1x8x1xf32>
    %90 = arith.mulf %89, %88 : vector<1x8x1xf32>
    %c0_38 = arith.constant 0 : index
    %c0_39 = arith.constant 0 : index
    %91 = vector.load %arg7[%c0_38, %c0_39] : memref<8x1xf32, #tpu.memory_space<vmem>>, vector<8x1xf32>
    %92 = arith.mulf %75, %90 : vector<1x8x1xf32>
    %93 = vector.shape_cast %91 : vector<8x1xf32> to vector<1x8x1xf32>
    %94 = arith.subf %93, %92 : vector<1x8x1xf32>
    %95 = vector.broadcast %90 : vector<1x8x1xf32> to vector<2x8x16xf32>
    %96 = arith.mulf %69, %95 : vector<2x8x16xf32>
    %97 = vector.broadcast %94 : vector<1x8x1xf32> to vector<2x8x16xf32>
    %98 = arith.addf %96, %97 : vector<2x8x16xf32>
    %99 = arith.addf %98, %5 : vector<2x8x16xf32>
    %cst_40 = arith.constant 1.000000e-01 : f32
    %100 = vector.broadcast %cst_40 : f32 to vector<2x8x16xf32>
    %101 = arith.mulf %100, %99 : vector<2x8x16xf32>
    %102 = arith.maximumf %99, %101 : vector<2x8x16xf32>
    %c0_41 = arith.constant 0 : index
    %c0_42 = arith.constant 0 : index
    %c0_43 = arith.constant 0 : index
    %103 = vector.load %arg8[%c0_41, %c0_42, %c0_43] : memref<2x8x16xf32, #tpu.memory_space<vmem>>, vector<2x8x16xf32>
    tpu.vector_store %arg8[%c0_41, %c0_42, %c0_43], %102 {strides = array<i32>} : memref<2x8x16xf32, #tpu.memory_space<vmem>>, vector<2x8x16xf32>,
    return
  }
}

</mosaic_0001>

<llo_original>
// kernel: tpu_custom_call.1
$region0: #{tpu_custom_call.1}
  #allocation0 [shape = 'u32[]', space=smem, size = 0x4, offset = 0x4, fixed_abs, tag = 'smem constant byte address 0x4 - core index']
  #allocation1 [shape = 'u32[144,128]{1,0:T(1,128)}', space=vmem, size = 0x12000, scoped, tag = 'internal scratch']
  %s0 = inlined_call_operand.vmem [shape: f32[2,8,16], index: 0, kind: input, shape index: {}]
  %s1 = inlined_call_operand.vmem [shape: f32[2,8,16], index: 1, kind: input, shape index: {}]
  %s2 = inlined_call_operand.hbm [shape: f32[8,24], index: 2, kind: input, shape index: {}]
  %s3 = inlined_call_operand.vmem [shape: f32[8,1], index: 3, kind: input, shape index: {}]
  %s4 = inlined_call_operand.vmem [shape: f32[8,1], index: 4, kind: input, shape index: {}]
  %s5 = inlined_call_operand.vmem [shape: f32[8,24], index: 5, kind: input, shape index: {}]
  %s6 = inlined_call_operand.vmem [shape: f32[8,1], index: 6, kind: input, shape index: {}]
  %s7 = inlined_call_operand.vmem [shape: f32[8,1], index: 7, kind: input, shape index: {}]
  %s8 = inlined_call_operand.hbm [shape: f32[2,8,16], index: 8, kind: output, shape index: {}]
  %s9 = sld [smem:[#allocation0]]
  $region46: #{tpu_custom_call.1} parent=0
    _
  %s11 = ssub.s32 1, %s9
  %s12 = scalar_select 0, %s11, %s9
  $region1: #{tpu_custom_call.1} parent=0
    #allocation2 [shape = 'u8[4096]{0}', space=vmem, size = 0x1000, scoped, tag = 'input window, operand 2, single buffered']
    #allocation3 [shape = 's32[1]{0}', space=sflag, size = 0x4, scoped, tag = 'scoped memory for tpu_custom_call.1']
    #allocation4 [shape = 's32[1]{0}', space=sflag, size = 0x4, scoped, tag = 'scoped memory for tpu_custom_call.1']
    #allocation5 [shape = 'u8[8192]{0}', space=vmem, size = 0x2000, scoped, tag = 'output window, operand 0, single buffered']
    %13 = vsyncpa [#allocation3], 0
    %14 = vsyncpa [#allocation4], 0
    // Predicated region
    $region2: #{tpu_custom_call.1} parent=1 // pred_check
      _
    $region3: #{tpu_custom_call.1} parent=1 // pred_check_branch
      %16 = sbr.rel (0) target = $region5
    $region4: #{tpu_custom_call.1} parent=1 // pred_region
      _
    $region5: #{tpu_custom_call.1} parent=1 // pred_fallthru
      _
    // Predicated region
    $region6: #{tpu_custom_call.1} parent=1 // pred_check
      _
    $region7: #{tpu_custom_call.1} parent=1 // pred_check_branch
      %18 = sbr.rel (0) target = $region9
    $region8: #{tpu_custom_call.1} parent=1 // pred_region
      _
    $region9: #{tpu_custom_call.1} parent=1 // pred_fallthru
      _
    // Predicated region
    $region10: #{tpu_custom_call.1} parent=1 // pred_check
      _
    $region11: #{tpu_custom_call.1} parent=1 // pred_check_branch
      %20 = sbr.rel (0) target = $region13
    $region12: #{tpu_custom_call.1} parent=1 // pred_region
      %s22 = ssub.s32 128, 128
      %23 = vsyncadd [#allocation3], %s22
      %s25 = sshll.u32 [#allocation2], 4
      %s26 = int_to_ptr.vmem [resolvable:$true] %s25
      %28 = dma.hbm_to_vmem [thread:$0]  %s2, 128, %s26, [#allocation3]
    $region13: #{tpu_custom_call.1} parent=1 // pred_fallthru
      _
    // Predicated region
    $region14: #{tpu_custom_call.1} parent=1 // pred_check
      _
    $region15: #{tpu_custom_call.1} parent=1 // pred_check_branch
      %30 = sbr.rel (0) target = $region17
    $region16: #{tpu_custom_call.1} parent=1 // pred_region
      _
    $region17: #{tpu_custom_call.1} parent=1 // pred_fallthru
      _
    // Predicated region
    $region18: #{tpu_custom_call.1} parent=1 // pred_check
      _
    $region19: #{tpu_custom_call.1} parent=1 // pred_check_branch
      %32 = sbr.rel (0) target = $region21
    $region20: #{tpu_custom_call.1} parent=1 // pred_region
      _
    $region21: #{tpu_custom_call.1} parent=1 // pred_fallthru
      _
    // Predicated region
    $region22: #{tpu_custom_call.1} parent=1 // pred_check
      _
    $region23: #{tpu_custom_call.1} parent=1 // pred_check_branch
      %34 = sbr.rel (0) target = $region25
    $region24: #{tpu_custom_call.1} parent=1 // pred_region
      _
    $region25: #{tpu_custom_call.1} parent=1 // pred_fallthru
      _
    // Predicated region
    $region26: #{tpu_custom_call.1} parent=1 // pred_check
      _
    $region27: #{tpu_custom_call.1} parent=1 // pred_check_branch
      %36 = sbr.rel (0) target = $region29
    $region28: #{tpu_custom_call.1} parent=1 // pred_region
      _
    $region29: #{tpu_custom_call.1} parent=1 // pred_fallthru
      _
    // Predicated region
    $region30: #{tpu_custom_call.1} parent=1 // pred_check
      _
    $region31: #{tpu_custom_call.1} parent=1 // pred_check_branch
      %38 = sbr.rel (0) target = $region33
    $region32: #{tpu_custom_call.1} parent=1 // pred_region
      _
    $region33: #{tpu_custom_call.1} parent=1 // pred_fallthru
      _
    // Predicated region
    $region34: #{tpu_custom_call.1} parent=1 // pred_check
      _
    $region35: #{tpu_custom_call.1} parent=1 // pred_check_branch
      %40 = sbr.rel (0) target = $region37
    $region36: #{tpu_custom_call.1} parent=1 // pred_region
      %41 = dma.done [#allocation3], 128
    $region37: #{tpu_custom_call.1} parent=1 // pred_fallthru
      _
    %v42 = vlaneseq
    %v43 = vand.u32 %v42, 127
    %vm44 = vcmp.ge.s32.totalorder %v43, 1
    %vm45 = vcmp.le.s32.totalorder %v43, 14
    %v46 = vld [vmem:[%s0] sm:$0xff]
    %v47 = vld [vmem:[%s0 + $0x8] sm:$0xff]
    %vm48 = vcmask 1047680
    %49 = vrot.lane.b32.xlu0 %v46, 16
    %v50 = vpop.permute.xlu0 %49
    %v51 = vsel %vm48, %v50, %v46
    %52 = vrot.lane.b32.xlu0 %v47, 16
    %v53 = vpop.permute.xlu0 %52
    %v54 = vsel %vm48, %v53, %v47
    %55 = vrot.lane.b32.xlu0 %v51, 16
    %v56 = vpop.permute.xlu0 %55
    %57 = vrot.lane.b32.xlu0 %v54, 16
    %v58 = vpop.permute.xlu0 %57
    %v59 = vsel %vm48, %v56, %v46
    %v60 = vsel %vm48, %v58, %v47
    %v61 = vsel %vm44, 1, 0
    %vm62 = vcmp.eq.s32.totalorder %v61, 1
    %65 = vrot.lane.b32.xlu0 %v59, 113
    %v66 = vpop.permute.xlu0 %65
    %67 = vrot.lane.b32.xlu0 %v60, 113
    %v68 = vpop.permute.xlu0 %67
    %v71 = vsel %vm62, %v66, 0.0
    %v72 = vsel %vm62, %v68, 0.0
    %v73 = vsel %vm45, 1, 0
    %vm74 = vcmp.eq.s32.totalorder %v73, 1
    %75 = vrot.lane.b32.xlu0 %v59, 127
    %v76 = vpop.permute.xlu0 %75
    %77 = vrot.lane.b32.xlu0 %v60, 127
    %v78 = vpop.permute.xlu0 %77
    %v81 = vsel %vm74, %v76, 0.0
    %v82 = vsel %vm74, %v78, 0.0
    %v83 = vld [vmem:[#allocation2] sm:$0xff]
    %vm84 = vcmask 195584
    %v86 = vsel %vm84, %v83, 0
    %88 = vmatprep.subr.mxu0 0.0
    %89 = vmatpush1.msra.mxu0 0.0
    %90 = vmatprep.subr.mxu0 0.0
    %91 = vmatpush1.msra.mxu0 0.0
    %92 = vmatprep.subr.mxu0 0.0
    %93 = vmatpush1.msra.mxu0 0.0
    %94 = vmatprep.subr.mxu0 0.0
    %95 = vmatpush1.msra.mxu0 0.0
    %96 = vmatprep.subr.mxu0 0.0
    %97 = vmatpush1.msra.mxu0 0.0
    %98 = vmatprep.subr.mxu0 0.0
    %99 = vmatpush1.msra.mxu0 0.0
    %100 = vmatprep.subr.mxu0 0.0
    %101 = vmatpush1.msra.mxu0 0.0
    %102 = vmatprep.subr.mxu0 0.0
    %103 = vmatpush1.msra.mxu0 0.0
    %104 = vmatprep.subr.mxu0 0.0
    %105 = vmatpush1.msra.mxu0 0.0
    %106 = vmatprep.subr.mxu0 0.0
    %107 = vmatpush1.msra.mxu0 0.0
    %108 = vmatprep.subr.mxu0 0.0
    %109 = vmatpush1.msra.mxu0 0.0
    %110 = vmatprep.subr.mxu0 0.0
    %111 = vmatpush1.msra.mxu0 0.0
    %112 = vmatprep.subr.mxu0 0.0
    %113 = vmatpush1.msra.mxu0 0.0
    %114 = vmatprep.subr.mxu0 0.0
    %115 = vmatpush1.msra.mxu0 %v81
    %116 = vmatprep.subr.mxu0 0.0
    %117 = vmatpush1.msra.mxu0 %v46
    %118 = vmatprep.subr.mxu0 0.0
    %119 = vmatpush1.msra.mxu0 %v71
    %120 = vmatprep.subr.mxu0 0.0
    %121 = vmatpush2.msra.mxu0 0.0
    %122 = vmatprep.subr.mxu0 0.0
    %123 = vmatpush2.msra.mxu0 0.0
    %124 = vmatprep.subr.mxu0 0.0
    %125 = vmatpush2.msra.mxu0 0.0
    %126 = vmatprep.subr.mxu0 0.0
    %127 = vmatpush2.msra.mxu0 0.0
    %128 = vmatprep.subr.mxu0 0.0
    %129 = vmatpush2.msra.mxu0 0.0
    %130 = vmatprep.subr.mxu0 0.0
    %131 = vmatpush2.msra.mxu0 0.0
    %132 = vmatprep.subr.mxu0 0.0
    %133 = vmatpush2.msra.mxu0 0.0
    %134 = vmatprep.subr.mxu0 0.0
    %135 = vmatpush2.msra.mxu0 0.0
    %136 = vmatprep.subr.mxu0 0.0
    %137 = vmatpush2.msra.mxu0 0.0
    %138 = vmatprep.subr.mxu0 0.0
    %139 = vmatpush2.msra.mxu0 0.0
    %140 = vmatprep.subr.mxu0 0.0
    %141 = vmatpush2.msra.mxu0 0.0
    %142 = vmatprep.subr.mxu0 0.0
    %143 = vmatpush2.msra.mxu0 0.0
    %144 = vmatprep.subr.mxu0 0.0
    %145 = vmatpush2.msra.mxu0 0.0
    %146 = vmatprep.subr.mxu0 0.0
    %147 = vmatpush2.msra.mxu0 0.0
    %148 = vmatprep.subr.mxu0 0.0
    %149 = vmatpush2.msra.mxu0 0.0
    %150 = vmatprep.subr.mxu0 0.0
    %151 = vmatpush2.msra.mxu0 0.0
    %152 = vmatprep.mubr.f32.mxu0 0.0
    %153 = vmatmul.mubr.f32.gmra.mxu0 %v86
    %v154 = vpop.f32.mrf.mxu0
    %v155 = vadd.f32 0.0, %v154
    %v156 = vpop.f32.mrf.mxu0
    %157 = vdwg.mxu0
    %158 = vmatprep.subr.mxu0 0.0
    %159 = vmatpush1.msra.mxu0 0.0
    %160 = vmatprep.subr.mxu0 0.0
    %161 = vmatpush1.msra.mxu0 0.0
    %162 = vmatprep.subr.mxu0 0.0
    %163 = vmatpush1.msra.mxu0 0.0
    %164 = vmatprep.subr.mxu0 0.0
    %165 = vmatpush1.msra.mxu0 0.0
    %166 = vmatprep.subr.mxu0 0.0
    %167 = vmatpush1.msra.mxu0 0.0
    %168 = vmatprep.subr.mxu0 0.0
    %169 = vmatpush1.msra.mxu0 0.0
    %170 = vmatprep.subr.mxu0 0.0
    %171 = vmatpush1.msra.mxu0 0.0
    %172 = vmatprep.subr.mxu0 0.0
    %173 = vmatpush1.msra.mxu0 0.0
    %174 = vmatprep.subr.mxu0 0.0
    %175 = vmatpush1.msra.mxu0 0.0
    %176 = vmatprep.subr.mxu0 0.0
    %177 = vmatpush1.msra.mxu0 0.0
    %178 = vmatprep.subr.mxu0 0.0
    %179 = vmatpush1.msra.mxu0 0.0
    %180 = vmatprep.subr.mxu0 0.0
    %181 = vmatpush1.msra.mxu0 0.0
    %182 = vmatprep.subr.mxu0 0.0
    %183 = vmatpush1.msra.mxu0 0.0
    %184 = vmatprep.subr.mxu0 0.0
    %185 = vmatpush1.msra.mxu0 %v82
    %186 = vmatprep.subr.mxu0 0.0
    %187 = vmatpush1.msra.mxu0 %v47
    %188 = vmatprep.subr.mxu0 0.0
    %189 = vmatpush1.msra.mxu0 %v72
    %190 = vmatprep.subr.mxu0 0.0
    %191 = vmatpush2.msra.mxu0 0.0
    %192 = vmatprep.subr.mxu0 0.0
    %193 = vmatpush2.msra.mxu0 0.0
    %194 = vmatprep.subr.mxu0 0.0
    %195 = vmatpush2.msra.mxu0 0.0
    %196 = vmatprep.subr.mxu0 0.0
    %197 = vmatpush2.msra.mxu0 0.0
    %198 = vmatprep.subr.mxu0 0.0
    %199 = vmatpush2.msra.mxu0 0.0
    %200 = vmatprep.subr.mxu0 0.0
    %201 = vmatpush2.msra.mxu0 0.0
    %202 = vmatprep.subr.mxu0 0.0
    %203 = vmatpush2.msra.mxu0 0.0
    %204 = vmatprep.subr.mxu0 0.0
    %205 = vmatpush2.msra.mxu0 0.0
    %206 = vmatprep.subr.mxu0 0.0
    %207 = vmatpush2.msra.mxu0 0.0
    %208 = vmatprep.subr.mxu0 0.0
    %209 = vmatpush2.msra.mxu0 0.0
    %210 = vmatprep.subr.mxu0 0.0
    %211 = vmatpush2.msra.mxu0 0.0
    %212 = vmatprep.subr.mxu0 0.0
    %213 = vmatpush2.msra.mxu0 0.0
    %214 = vmatprep.subr.mxu0 0.0
    %215 = vmatpush2.msra.mxu0 0.0
    %216 = vmatprep.subr.mxu0 0.0
    %217 = vmatpush2.msra.mxu0 0.0
    %218 = vmatprep.subr.mxu0 0.0
    %219 = vmatpush2.msra.mxu0 0.0
    %220 = vmatprep.subr.mxu0 0.0
    %221 = vmatpush2.msra.mxu0 0.0
    %222 = vmatprep.mubr.f32.mxu0 0.0
    %223 = vmatmul.mubr.f32.gmra.mxu0 %v86
    %v224 = vpop.f32.mrf.mxu0
    %v225 = vadd.f32 0.0, %v224
    %v226 = vpop.f32.mrf.mxu0
    %227 = vdwg.mxu0
    %vm228 = vcmask 130048
    %v229 = vsel %vm228, %v155, 0.0
    %230 = vadd.xlane.f32.xlu0 %v229
    %v231 = vpop.xlane.xlu0 %230
    %v232 = vsel %vm228, %v225, 0.0
    %233 = vadd.xlane.f32.xlu0 %v232
    %v234 = vpop.xlane.xlu0 %233
    %v235 = vadd.f32 %v231, %v234
    %v236 = vmul.f32 %v235, 0.03125
    %v237 = vsub.f32 %v155, %v236
    %v238 = vsub.f32 %v225, %v236
    %v239 = vmul.f32 %v237, %v237
    %v240 = vmul.f32 %v238, %v238
    %v241 = vsel %vm228, %v239, 0.0
    %242 = vadd.xlane.f32.xlu0 %v241
    %v243 = vpop.xlane.xlu0 %242
    %v244 = vsel %vm228, %v240, 0.0
    %245 = vadd.xlane.f32.xlu0 %v244
    %v246 = vpop.xlane.xlu0 %245
    %v247 = vadd.f32 %v243, %v246
    %v248 = vmul.f32 %v247, 0.03125
    %v249 = vld [vmem:[%s3] sm:$0xff]
    %v250 = vadd.f32 %v248, 1e-05
    %v251 = vrsqrt.pop %v250
    %v252 = vmul.f32 %v249, %v251
    %v253 = vld [vmem:[%s4] sm:$0xff]
    %v254 = vmul.f32 %v236, %v252
    %v255 = vsub.f32 %v253, %v254
    %257 = vset.pattern.permute.xlu0 0
    %258 = vperm.xlu0 %257, %v252
    %v259 = vpop.permute.xlu0 %258
    %v261 = vmul.f32 %v155, %v259
    %v262 = vmul.f32 %v225, %v259
    %264 = vset.pattern.permute.xlu0 0
    %265 = vperm.xlu0 %264, %v255
    %v266 = vpop.permute.xlu0 %265
    %v268 = vadd.f32 %v261, %v266
    %v269 = vadd.f32 %v262, %v266
    %v270 = vmul.f32 %v268, 0.1
    %v271 = vmul.f32 %v269, 0.1
    %v272 = vmax.f32 %v268, %v270
    %v273 = vmax.f32 %v269, %v271
    %v274 = vld [vmem:[%s1] sm:$0xff]
    %v275 = vld [vmem:[%s1 + $0x8] sm:$0xff]
    %v276 = vmul.f32 %v272, %v274
    %v277 = vmul.f32 %v273, %v275
    %278 = vrot.lane.b32.xlu0 %v276, 16
    %v279 = vpop.permute.xlu0 %278
    %v280 = vsel %vm48, %v279, %v276
    %281 = vrot.lane.b32.xlu0 %v277, 16
    %v282 = vpop.permute.xlu0 %281
    %v283 = vsel %vm48, %v282, %v277
    %284 = vrot.lane.b32.xlu0 %v280, 16
    %v285 = vpop.permute.xlu0 %284
    %286 = vrot.lane.b32.xlu0 %v283, 16
    %v287 = vpop.permute.xlu0 %286
    %v288 = vsel %vm48, %v285, %v276
    %v289 = vsel %vm48, %v287, %v277
    %292 = vrot.lane.b32.xlu0 %v288, 113
    %v293 = vpop.permute.xlu0 %292
    %294 = vrot.lane.b32.xlu0 %v289, 113
    %v295 = vpop.permute.xlu0 %294
    %v298 = vsel %vm62, %v293, 0.0
    %v299 = vsel %vm62, %v295, 0.0
    %300 = vrot.lane.b32.xlu0 %v288, 127
    %v301 = vpop.permute.xlu0 %300
    %302 = vrot.lane.b32.xlu0 %v289, 127
    %v303 = vpop.permute.xlu0 %302
    %v306 = vsel %vm74, %v301, 0.0
    %v307 = vsel %vm74, %v303, 0.0
    %v308 = vld [vmem:[%s5] sm:$0xff]
    %v310 = vsel %vm84, %v308, 0
    %312 = vmatprep.subr.mxu0 0.0
    %313 = vmatpush1.msra.mxu0 0.0
    %314 = vmatprep.subr.mxu0 0.0
    %315 = vmatpush1.msra.mxu0 0.0
    %316 = vmatprep.subr.mxu0 0.0
    %317 = vmatpush1.msra.mxu0 0.0
    %318 = vmatprep.subr.mxu0 0.0
    %319 = vmatpush1.msra.mxu0 0.0
    %320 = vmatprep.subr.mxu0 0.0
    %321 = vmatpush1.msra.mxu0 0.0
    %322 = vmatprep.subr.mxu0 0.0
    %323 = vmatpush1.msra.mxu0 0.0
    %324 = vmatprep.subr.mxu0 0.0
    %325 = vmatpush1.msra.mxu0 0.0
    %326 = vmatprep.subr.mxu0 0.0
    %327 = vmatpush1.msra.mxu0 0.0
    %328 = vmatprep.subr.mxu0 0.0
    %329 = vmatpush1.msra.mxu0 0.0
    %330 = vmatprep.subr.mxu0 0.0
    %331 = vmatpush1.msra.mxu0 0.0
    %332 = vmatprep.subr.mxu0 0.0
    %333 = vmatpush1.msra.mxu0 0.0
    %334 = vmatprep.subr.mxu0 0.0
    %335 = vmatpush1.msra.mxu0 0.0
    %336 = vmatprep.subr.mxu0 0.0
    %337 = vmatpush1.msra.mxu0 0.0
    %338 = vmatprep.subr.mxu0 0.0
    %339 = vmatpush1.msra.mxu0 %v306
    %340 = vmatprep.subr.mxu0 0.0
    %341 = vmatpush1.msra.mxu0 %v276
    %342 = vmatprep.subr.mxu0 0.0
    %343 = vmatpush1.msra.mxu0 %v298
    %344 = vmatprep.subr.mxu0 0.0
    %345 = vmatpush2.msra.mxu0 0.0
    %346 = vmatprep.subr.mxu0 0.0
    %347 = vmatpush2.msra.mxu0 0.0
    %348 = vmatprep.subr.mxu0 0.0
    %349 = vmatpush2.msra.mxu0 0.0
    %350 = vmatprep.subr.mxu0 0.0
    %351 = vmatpush2.msra.mxu0 0.0
    %352 = vmatprep.subr.mxu0 0.0
    %353 = vmatpush2.msra.mxu0 0.0
    %354 = vmatprep.subr.mxu0 0.0
    %355 = vmatpush2.msra.mxu0 0.0
    %356 = vmatprep.subr.mxu0 0.0
    %357 = vmatpush2.msra.mxu0 0.0
    %358 = vmatprep.subr.mxu0 0.0
    %359 = vmatpush2.msra.mxu0 0.0
    %360 = vmatprep.subr.mxu0 0.0
    %361 = vmatpush2.msra.mxu0 0.0
    %362 = vmatprep.subr.mxu0 0.0
    %363 = vmatpush2.msra.mxu0 0.0
    %364 = vmatprep.subr.mxu0 0.0
    %365 = vmatpush2.msra.mxu0 0.0
    %366 = vmatprep.subr.mxu0 0.0
    %367 = vmatpush2.msra.mxu0 0.0
    %368 = vmatprep.subr.mxu0 0.0
    %369 = vmatpush2.msra.mxu0 0.0
    %370 = vmatprep.subr.mxu0 0.0
    %371 = vmatpush2.msra.mxu0 0.0
    %372 = vmatprep.subr.mxu0 0.0
    %373 = vmatpush2.msra.mxu0 0.0
    %374 = vmatprep.subr.mxu0 0.0
    %375 = vmatpush2.msra.mxu0 0.0
    %376 = vmatprep.mubr.f32.mxu0 0.0
    %377 = vmatmul.mubr.f32.gmra.mxu0 %v310
    %v378 = vpop.f32.mrf.mxu0
    %v379 = vadd.f32 0.0, %v378
    %v380 = vpop.f32.mrf.mxu0
    %381 = vdwg.mxu0
    %382 = vmatprep.subr.mxu0 0.0
    %383 = vmatpush1.msra.mxu0 0.0
    %384 = vmatprep.subr.mxu0 0.0
    %385 = vmatpush1.msra.mxu0 0.0
    %386 = vmatprep.subr.mxu0 0.0
    %387 = vmatpush1.msra.mxu0 0.0
    %388 = vmatprep.subr.mxu0 0.0
    %389 = vmatpush1.msra.mxu0 0.0
    %390 = vmatprep.subr.mxu0 0.0
    %391 = vmatpush1.msra.mxu0 0.0
    %392 = vmatprep.subr.mxu0 0.0
    %393 = vmatpush1.msra.mxu0 0.0
    %394 = vmatprep.subr.mxu0 0.0
    %395 = vmatpush1.msra.mxu0 0.0
    %396 = vmatprep.subr.mxu0 0.0
    %397 = vmatpush1.msra.mxu0 0.0
    %398 = vmatprep.subr.mxu0 0.0
    %399 = vmatpush1.msra.mxu0 0.0
    %400 = vmatprep.subr.mxu0 0.0
    %401 = vmatpush1.msra.mxu0 0.0
    %402 = vmatprep.subr.mxu0 0.0
    %403 = vmatpush1.msra.mxu0 0.0
    %404 = vmatprep.subr.mxu0 0.0
    %405 = vmatpush1.msra.mxu0 0.0
    %406 = vmatprep.subr.mxu0 0.0
    %407 = vmatpush1.msra.mxu0 0.0
    %408 = vmatprep.subr.mxu0 0.0
    %409 = vmatpush1.msra.mxu0 %v307
    %410 = vmatprep.subr.mxu0 0.0
    %411 = vmatpush1.msra.mxu0 %v277
    %412 = vmatprep.subr.mxu0 0.0
    %413 = vmatpush1.msra.mxu0 %v299
    %414 = vmatprep.subr.mxu0 0.0
    %415 = vmatpush2.msra.mxu0 0.0
    %416 = vmatprep.subr.mxu0 0.0
    %417 = vmatpush2.msra.mxu0 0.0
    %418 = vmatprep.subr.mxu0 0.0
    %419 = vmatpush2.msra.mxu0 0.0
    %420 = vmatprep.subr.mxu0 0.0
    %421 = vmatpush2.msra.mxu0 0.0
    %422 = vmatprep.subr.mxu0 0.0
    %423 = vmatpush2.msra.mxu0 0.0
    %424 = vmatprep.subr.mxu0 0.0
    %425 = vmatpush2.msra.mxu0 0.0
    %426 = vmatprep.subr.mxu0 0.0
    %427 = vmatpush2.msra.mxu0 0.0
    %428 = vmatprep.subr.mxu0 0.0
    %429 = vmatpush2.msra.mxu0 0.0
    %430 = vmatprep.subr.mxu0 0.0
    %431 = vmatpush2.msra.mxu0 0.0
    %432 = vmatprep.subr.mxu0 0.0
    %433 = vmatpush2.msra.mxu0 0.0
    %434 = vmatprep.subr.mxu0 0.0
    %435 = vmatpush2.msra.mxu0 0.0
    %436 = vmatprep.subr.mxu0 0.0
    %437 = vmatpush2.msra.mxu0 0.0
    %438 = vmatprep.subr.mxu0 0.0
    %439 = vmatpush2.msra.mxu0 0.0
    %440 = vmatprep.subr.mxu0 0.0
    %441 = vmatpush2.msra.mxu0 0.0
    %442 = vmatprep.subr.mxu0 0.0
    %443 = vmatpush2.msra.mxu0 0.0
    %444 = vmatprep.subr.mxu0 0.0
    %445 = vmatpush2.msra.mxu0 0.0
    %446 = vmatprep.mubr.f32.mxu0 0.0
    %447 = vmatmul.mubr.f32.gmra.mxu0 %v310
    %v448 = vpop.f32.mrf.mxu0
    %v449 = vadd.f32 0.0, %v448
    %v450 = vpop.f32.mrf.mxu0
    %451 = vdwg.mxu0
    %v452 = vsel %vm228, %v379, 0.0
    %453 = vadd.xlane.f32.xlu0 %v452
    %v454 = vpop.xlane.xlu0 %453
    %v455 = vsel %vm228, %v449, 0.0
    %456 = vadd.xlane.f32.xlu0 %v455
    %v457 = vpop.xlane.xlu0 %456
    %v458 = vadd.f32 %v454, %v457
    %v459 = vmul.f32 %v458, 0.03125
    %v460 = vsub.f32 %v379, %v459
    %v461 = vsub.f32 %v449, %v459
    %v462 = vmul.f32 %v460, %v460
    %v463 = vmul.f32 %v461, %v461
    %v464 = vsel %vm228, %v462, 0.0
    %465 = vadd.xlane.f32.xlu0 %v464
    %v466 = vpop.xlane.xlu0 %465
    %v467 = vsel %vm228, %v463, 0.0
    %468 = vadd.xlane.f32.xlu0 %v467
    %v469 = vpop.xlane.xlu0 %468
    %v470 = vadd.f32 %v466, %v469
    %v471 = vmul.f32 %v470, 0.03125
    %v472 = vld [vmem:[%s6] sm:$0xff]
    %v473 = vadd.f32 %v471, 1e-05
    %v474 = vrsqrt.pop %v473
    %v475 = vmul.f32 %v472, %v474
    %v476 = vld [vmem:[%s7] sm:$0xff]
    %v477 = vmul.f32 %v459, %v475
    %v478 = vsub.f32 %v476, %v477
    %480 = vset.pattern.permute.xlu0 0
    %481 = vperm.xlu0 %480, %v475
    %v482 = vpop.permute.xlu0 %481
    %v484 = vmul.f32 %v379, %v482
    %v485 = vmul.f32 %v449, %v482
    %487 = vset.pattern.permute.xlu0 0
    %488 = vperm.xlu0 %487, %v478
    %v489 = vpop.permute.xlu0 %488
    %v491 = vadd.f32 %v484, %v489
    %v492 = vadd.f32 %v485, %v489
    %v493 = vadd.f32 %v491, %v46
    %v494 = vadd.f32 %v492, %v47
    %v495 = vmul.f32 %v493, 0.1
    %v496 = vmul.f32 %v494, 0.1
    %v497 = vmax.f32 %v493, %v495
    %v498 = vmax.f32 %v494, %v496
    %499 = vst.msk [vmem:[#allocation5] sm:$0xff] %vm228, %v497
    %500 = vst.msk [vmem:[#allocation5 + $0x8] sm:$0xff] %vm228, %v498
    // Predicated region
    $region38: #{tpu_custom_call.1} parent=1 // pred_check
      _
    $region39: #{tpu_custom_call.1} parent=1 // pred_check_branch
      %502 = sbr.rel (0) target = $region41
    $region40: #{tpu_custom_call.1} parent=1 // pred_region
      %s504 = ssub.s32 256, 256
      %505 = vsyncadd [#allocation4], %s504
      %s506 = sshll.u32 [#allocation5], 4
      %s507 = int_to_ptr.vmem [resolvable:$true] %s506
      %512 = dma.vmem_to_hbm [thread:$0]  %s507, 256, %s8, [#allocation4], 128, 128, 8
    $region41: #{tpu_custom_call.1} parent=1 // pred_fallthru
      _
    // Predicated region
    $region42: #{tpu_custom_call.1} parent=1 // pred_check
      _
    $region43: #{tpu_custom_call.1} parent=1 // pred_check_branch
      %514 = sbr.rel (0) target = $region45
    $region44: #{tpu_custom_call.1} parent=1 // pred_region
      %515 = dma.done [#allocation4], 256
    $region45: #{tpu_custom_call.1} parent=1 // pred_fallthru
      _
    %516 = vsyncpa [#allocation3], 1
    %517 = vsyncpa [#allocation4], 1

</llo_original>
